<compile_context>
chip_gen: v7x
topology: tpu7x:2x2x1
jax: 0.10.0
libtpu: 0.0.40
codegen_flags: <defaults>
</compile_context>

<pallas_src>
import functools
import math

import jax
import jax.numpy as jnp
from jax import lax
from jax.experimental import pallas as pl
from jax.experimental.pallas import tpu as pltpu


# -----------------------------------------------------------------------------
# Hardware-aware helpers
# -----------------------------------------------------------------------------
@functools.lru_cache(maxsize=None)
def _vmem_capacity_bytes():
    """Physical VMEM of the attached TPU (falls back to 128 MiB)."""
    try:
        return int(getattr(pltpu.get_tpu_info(), "vmem_capacity_bytes",
                           128 * 1024 * 1024))
    except Exception:
        return 128 * 1024 * 1024


def _vmem_limit(estimate_bytes):
    # Generation-aware ceiling: ~100 MiB on v5e/v6e (128 MiB physical),
    # ~51 MiB on v7x (64 MiB physical) so Mosaic keeps internal-scratch headroom.
    ceiling = min(int(0.8 * _vmem_capacity_bytes()), 100 * 1024 * 1024)
    return int(min(ceiling, max(32 * 1024 * 1024, 3 * estimate_bytes)))


def _default_proj_tiles():
    # Bigger M/N tiles on 128 MiB parts halve weight/activation re-fetches.
    if _vmem_capacity_bytes() >= 96 * 1024 * 1024:
        return 512, 512, 512      # v5e / v6e
    return 256, 256, 512          # v7x


def _sublane_align(dtype):
    # Minimum sublane tile: 8 (f32), 16 (bf16), 32 (int8/fp8).
    return max(8, 32 // jnp.dtype(dtype).itemsize)


def _choose_tile(dim, target, align):
    """Largest t <= target with t % align == 0 and dim % t == 0, else full dim."""
    if dim <= target:
        return dim
    t = (min(target, dim) // align) * align
    while t >= align:
        if dim % t == 0:
            return t
        t -= align
    return dim


# -----------------------------------------------------------------------------
# Tiled linear kernel (single matmul + bias)
# -----------------------------------------------------------------------------
def _linear_kernel(x_ref, w_ref, b_ref, o_ref, acc_ref):
    kk = pl.program_id(2)

    @pl.when(kk == 0)
    def _init():
        acc_ref[...] = jnp.zeros_like(acc_ref)

    acc_ref[...] += jnp.dot(x_ref[...], w_ref[...],
                            preferred_element_type=jnp.float32)

    @pl.when(kk == pl.num_programs(2) - 1)
    def _finalize():
        o_ref[...] = (acc_ref[...]
                      + b_ref[...].astype(jnp.float32)).astype(o_ref.dtype)


def pallas_linear(x2d, wt, b, *, tiles=None):
    """x2d: (M, K); wt: (K, N) pre-transposed weight; b: (N,) -> (M, N)."""
    M, K = x2d.shape
    K2, N = wt.shape
    assert K == K2
    tm0, tn0, tk0 = tiles if tiles is not None else _default_proj_tiles()
    tm = _choose_tile(M, tm0, _sublane_align(x2d.dtype))
    tn = _choose_tile(N, tn0, 128)
    tk = _choose_tile(K, tk0, 128)
    b2 = b.reshape(1, N)

    itemsize = x2d.dtype.itemsize
    est = (2 * (tm * tk + tk * tn + tn) * itemsize   # double-buffered inputs
           + 2 * tm * tn * itemsize                  # double-buffered output
           + tm * tn * 4)                            # f32 accumulator

    return pl.pallas_call(
        _linear_kernel,
        out_shape=jax.ShapeDtypeStruct((M, N), x2d.dtype),
        grid_spec=pltpu.PrefetchScalarGridSpec(
            num_scalar_prefetch=0,
            grid=(M // tm, N // tn, K // tk),
            in_specs=[
                pl.BlockSpec((tm, tk), lambda m, n, k: (m, k)),
                pl.BlockSpec((tk, tn), lambda m, n, k: (k, n)),
                pl.BlockSpec((1, tn), lambda m, n, k: (0, n)),
            ],
            out_specs=pl.BlockSpec((tm, tn), lambda m, n, k: (m, n)),
            scratch_shapes=[pltpu.VMEM((tm, tn), jnp.float32)],
        ),
        compiler_params=pltpu.CompilerParams(
            dimension_semantics=("parallel", "parallel", "arbitrary"),
            vmem_limit_bytes=_vmem_limit(est),
        ),
    )(x2d, wt, b2)


# -----------------------------------------------------------------------------
# Grouped Q/K/V projection: one pallas_call, three tiled matmuls sharing a grid
# -----------------------------------------------------------------------------
def _qkv_kernel(xq_ref, xk_ref, xv_ref, wq_ref, wk_ref, wv_ref,
                bq_ref, bk_ref, bv_ref, oq_ref, ok_ref, ov_ref,
                accq_ref, acck_ref, accv_ref):
    kk = pl.program_id(2)

    @pl.when(kk == 0)
    def _init():
        accq_ref[...] = jnp.zeros_like(accq_ref)
        acck_ref[...] = jnp.zeros_like(acck_ref)
        accv_ref[...] = jnp.zeros_like(accv_ref)

    accq_ref[...] += jnp.dot(xq_ref[...], wq_ref[...],
                             preferred_element_type=jnp.float32)
    acck_ref[...] += jnp.dot(xk_ref[...], wk_ref[...],
                             preferred_element_type=jnp.float32)
    accv_ref[...] += jnp.dot(xv_ref[...], wv_ref[...],
                             preferred_element_type=jnp.float32)

    @pl.when(kk == pl.num_programs(2) - 1)
    def _finalize():
        oq_ref[...] = (accq_ref[...] + bq_ref[...].astype(jnp.float32)).astype(oq_ref.dtype)
        ok_ref[...] = (acck_ref[...] + bk_ref[...].astype(jnp.float32)).astype(ok_ref.dtype)
        ov_ref[...] = (accv_ref[...] + bv_ref[...].astype(jnp.float32)).astype(ov_ref.dtype)


def _qkv_shared_kernel(x_ref, wq_ref, wk_ref, wv_ref,
                       bq_ref, bk_ref, bv_ref, oq_ref, ok_ref, ov_ref,
                       accq_ref, acck_ref, accv_ref):
    kk = pl.program_id(2)

    @pl.when(kk == 0)
    def _init():
        accq_ref[...] = jnp.zeros_like(accq_ref)
        acck_ref[...] = jnp.zeros_like(acck_ref)
        accv_ref[...] = jnp.zeros_like(accv_ref)

    x = x_ref[...]   # one activation DMA feeds all three matmuls
    accq_ref[...] += jnp.dot(x, wq_ref[...], preferred_element_type=jnp.float32)
    acck_ref[...] += jnp.dot(x, wk_ref[...], preferred_element_type=jnp.float32)
    accv_ref[...] += jnp.dot(x, wv_ref[...], preferred_element_type=jnp.float32)

    @pl.when(kk == pl.num_programs(2) - 1)
    def _finalize():
        oq_ref[...] = (accq_ref[...] + bq_ref[...].astype(jnp.float32)).astype(oq_ref.dtype)
        ok_ref[...] = (acck_ref[...] + bk_ref[...].astype(jnp.float32)).astype(ok_ref.dtype)
        ov_ref[...] = (accv_ref[...] + bv_ref[...].astype(jnp.float32)).astype(ov_ref.dtype)


def pallas_qkv_projection(xq, xk, xv, wqt, wkt, wvt, bq, bk, bv,
                          *, shared_x=False, tiles=None):
    """Project (M, K) activations with three (K, N) weights in one grouped call."""
    if not shared_x and (xq.shape != xk.shape or xq.shape != xv.shape):
        # Cross attention with different sequence lengths: three tiled calls.
        return (pallas_linear(xq, wqt, bq),
                pallas_linear(xk, wkt, bk),
                pallas_linear(xv, wvt, bv))

    M, K = xq.shape
    N = wqt.shape[1]
    tm0, tn0, tk0 = tiles if tiles is not None else _default_proj_tiles()
    tm = _choose_tile(M, tm0, _sublane_align(xq.dtype))
    tn = _choose_tile(N, tn0, 128)
    tk = _choose_tile(K, tk0, 128)

    bq2, bk2, bv2 = bq.reshape(1, N), bk.reshape(1, N), bv.reshape(1, N)

    itemsize = xq.dtype.itemsize
    n_x = 1 if shared_x else 3
    est = (2 * n_x * tm * tk * itemsize             # double-buffered activations
           + 3 * 2 * (tk * tn + tn) * itemsize      # double-buffered weights + bias
           + 3 * 2 * tm * tn * itemsize             # double-buffered outputs
           + 3 * tm * tn * 4)                       # f32 accumulators

    x_spec = pl.BlockSpec((tm, tk), lambda m, n, k: (m, k))
    w_spec = pl.BlockSpec((tk, tn), lambda m, n, k: (k, n))
    b_spec = pl.BlockSpec((1, tn), lambda m, n, k: (0, n))
    o_spec = pl.BlockSpec((tm, tn), lambda m, n, k: (m, n))

    out_sds = jax.ShapeDtypeStruct((M, N), xq.dtype)
    if shared_x:
        kernel = _qkv_shared_kernel
        in_specs = [x_spec, w_spec, w_spec, w_spec, b_spec, b_spec, b_spec]
        operands = (xq, wqt, wkt, wvt, bq2, bk2, bv2)
    else:
        kernel = _qkv_kernel
        in_specs = [x_spec, x_spec, x_spec, w_spec, w_spec, w_spec,
                    b_spec, b_spec, b_spec]
        operands = (xq, xk, xv, wqt, wkt, wvt, bq2, bk2, bv2)

    return pl.pallas_call(
        kernel,
        out_shape=(out_sds, out_sds, out_sds),
        grid_spec=pltpu.PrefetchScalarGridSpec(
            num_scalar_prefetch=0,
            grid=(M // tm, N // tn, K // tk),
            in_specs=in_specs,
            out_specs=[o_spec, o_spec, o_spec],
            scratch_shapes=[pltpu.VMEM((tm, tn), jnp.float32)] * 3,
        ),
        compiler_params=pltpu.CompilerParams(
            dimension_semantics=("parallel", "parallel", "arbitrary"),
            vmem_limit_bytes=_vmem_limit(est),
        ),
    )(*operands)


# -----------------------------------------------------------------------------
# Flash-style scaled-dot-product attention (heads folded into the blocks)
# -----------------------------------------------------------------------------
def _flash_attention_kernel(q_ref, k_ref, v_ref, o_ref,
                            m_ref, l_ref, acc_ref, *, num_heads):
    ki = pl.program_id(2)

    @pl.when(ki == 0)
    def _init():
        m_ref[...] = jnp.full_like(m_ref, -jnp.inf)
        l_ref[...] = jnp.zeros_like(l_ref)
        acc_ref[...] = jnp.zeros_like(acc_ref)

    # Blocks arrive in the natural (seq, head, head_dim) layout; 1/sqrt(D) is
    # already folded into the Q projection, so the score matrix is never
    # rescaled (saves tq*tkv VALU multiplies per kv step).
    for h in range(num_heads):                                  # static unroll
        q = q_ref[:, h, :]                                      # (tq, D)
        k = k_ref[:, h, :]                                      # (tkv, D)
        v = v_ref[:, h, :]                                      # (tkv, D)

        # scores = q @ k^T, contracting the last dims (no explicit transpose).
        s = lax.dot_general(q, k, (((1,), (1,)), ((), ())),
                            preferred_element_type=jnp.float32)

        m_prev = m_ref[h]                                       # (tq, 1)
        m_new = jnp.maximum(m_prev, jnp.max(s, axis=-1, keepdims=True))
        alpha = jnp.exp(m_prev - m_new)
        p = jnp.exp(s - m_new)

        l_ref[h] = alpha * l_ref[h] + jnp.sum(p, axis=-1, keepdims=True)
        acc_ref[h] = alpha * acc_ref[h] + jnp.dot(
            p.astype(v.dtype), v, preferred_element_type=jnp.float32)
        m_ref[h] = m_new

    @pl.when(ki == pl.num_programs(2) - 1)
    def _finalize():
        for h in range(num_heads):
            # Exact divide: runs once per q block, so the approximate EUP
            # reciprocal buys nothing and would inject ~1e-3 relative error.
            o_ref[:, h, :] = (acc_ref[h] / l_ref[h]).astype(o_ref.dtype)


def pallas_flash_attention(q, k, v, *, tq=256, tkv=512):
    """q: (B, Sq, H, D); k/v: (B, Skv, H, D) -> (B, Sq, H, D).

    The head split/merge is folded into the BlockSpecs: each block carries all
    heads of a sequence tile, so the caller never transposes to (B, H, S, D)
    and HBM transfers stay lane-dense (H*D wide) even when head_dim < 128.
    (tq=256 fills the 256x256 MXU on v6e/v7x; use tq=128 on v5e.)
    """
    B, Sq, H, D = q.shape
    Skv = k.shape[1]
    E = H * D

    tq = _choose_tile(Sq, tq, _sublane_align(q.dtype))
    tkv = _choose_tile(Skv, tkv, 128)

    itemsize = q.dtype.itemsize
    est = (2 * (tq + 2 * tkv) * E * itemsize     # double-buffered q, k, v blocks
           + 2 * tq * E * itemsize               # double-buffered output block
           + H * tq * (D + 2) * 4                # f32 acc / m / l scratch
           + 2 * tq * tkv * 4)                   # score/prob working-set headroom

    kernel = functools.partial(_flash_attention_kernel, num_heads=H)
    q_spec = pl.BlockSpec((None, tq, H, D), lambda b, qi, ki: (b, qi, 0, 0))
    kv_spec = pl.BlockSpec((None, tkv, H, D), lambda b, qi, ki: (b, ki, 0, 0))
    o_spec = pl.BlockSpec((None, tq, H, D), lambda b, qi, ki: (b, qi, 0, 0))

    return pl.pallas_call(
        kernel,
        out_shape=jax.ShapeDtypeStruct((B, Sq, H, D), q.dtype),
        grid_spec=pltpu.PrefetchScalarGridSpec(
            num_scalar_prefetch=0,
            grid=(B, Sq // tq, Skv // tkv),
            in_specs=[q_spec, kv_spec, kv_spec],
            out_specs=o_spec,
            scratch_shapes=[
                pltpu.VMEM((H, tq, 1), jnp.float32),   # running max
                pltpu.VMEM((H, tq, 1), jnp.float32),   # running sum
                pltpu.VMEM((H, tq, D), jnp.float32),   # output accumulator
            ],
        ),
        compiler_params=pltpu.CompilerParams(
            dimension_semantics=("parallel", "parallel", "arbitrary"),
            vmem_limit_bytes=_vmem_limit(est),
        ),
    )(q, k, v)


# -----------------------------------------------------------------------------
# Module
# -----------------------------------------------------------------------------
class MultiHeadAttentionPallas:
    def __init__(self, num_heads, embedding_dim, key, dtype=jnp.float32):
        assert embedding_dim % num_heads == 0
        self.num_heads = num_heads
        self.embedding_dim = embedding_dim
        self.head_dim = embedding_dim // num_heads

        def init_linear(k, fan_in, fan_out):
            kw, kb = jax.random.split(k)
            bound = 1.0 / math.sqrt(fan_in)
            w = jax.random.uniform(kw, (fan_out, fan_in), dtype, -bound, bound)
            b = jax.random.uniform(kb, (fan_out,), dtype, -bound, bound)
            return w, b

        k1, k2, k3, k4 = jax.random.split(key, 4)
        self.q_w, self.q_b = init_linear(k1, embedding_dim, embedding_dim)
        self.k_w, self.k_b = init_linear(k2, embedding_dim, embedding_dim)
        self.v_w, self.v_b = init_linear(k3, embedding_dim, embedding_dim)
        self.o_w, self.o_b = init_linear(k4, embedding_dim, embedding_dim)

        # Pre-transpose once (PyTorch stores (out, in); the MXU wants (in, out))
        # and fold the 1/sqrt(head_dim) softmax scale into the Q projection so
        # the attention kernel never rescales the (tq, tkv) score matrix.
        scale = 1.0 / math.sqrt(self.head_dim)
        self.q_wt = (self.q_w * scale).T
        self.q_bs = self.q_b * scale
        self.k_wt = self.k_w.T
        self.v_wt = self.v_w.T
        self.o_wt = self.o_w.T

    def __call__(self, q, k, v):
        B, Sq, E = q.shape
        Skv = k.shape[1]
        H, D = self.num_heads, self.head_dim

        shared = (q is k) and (k is v)            # self-attention: DMA x once
        q2d = q.reshape(B * Sq, E)
        k2d = q2d if shared else k.reshape(B * Skv, E)
        v2d = q2d if shared else v.reshape(B * Skv, E)

        q_p, k_p, v_p = pallas_qkv_projection(
            q2d, k2d, v2d,
            self.q_wt, self.k_wt, self.v_wt,
            self.q_bs, self.k_b, self.v_b,
            shared_x=shared)

        # Keep the natural (B, S, H, D) layout; the head split is folded into
        # the attention BlockSpecs, so these reshapes are free (no transposes).
        q_h = q_p.reshape(B, Sq, H, D)
        k_h = k_p.reshape(B, Skv, H, D)
        v_h = v_p.reshape(B, Skv, H, D)

        attn = pallas_flash_attention(q_h, k_h, v_h)       # (B, Sq, H, D)
        merged = attn.reshape(B * Sq, E)                   # free head merge

        out = pallas_linear(merged, self.o_wt, self.o_b)   # output projection
        return out.reshape(B, Sq, E)


# -----------------------------------------------------------------------------
# Plain-JAX reference for a sanity check
# -----------------------------------------------------------------------------
def reference_forward(module, q, k, v):
    B, Sq, E = q.shape
    Skv = k.shape[1]
    H, D = module.num_heads, module.head_dim

    def lin(x, w, b):
        return x @ w.T + b

    with jax.default_matmul_precision("highest"):
        qh = lin(q, module.q_w, module.q_b).reshape(B, Sq, H, D).transpose(0, 2, 1, 3)
        kh = lin(k, module.k_w, module.k_b).reshape(B, Skv, H, D).transpose(0, 2, 1, 3)
        vh = lin(v, module.v_w, module.v_b).reshape(B, Skv, H, D).transpose(0, 2, 1, 3)
        s = jnp.einsum("bhqd,bhkd->bhqk", qh, kh) / math.sqrt(D)
        p = jax.nn.softmax(s, axis=-1)
        o = jnp.einsum("bhqk,bhkd->bhqd", p, vh).transpose(0, 2, 1, 3).reshape(B, Sq, E)
        return lin(o, module.o_w, module.o_b)


if __name__ == "__main__":
    key = jax.random.PRNGKey(0)
    k_params, k_q, k_k, k_v = jax.random.split(key, 4)

    batch, seq, embedding_dim, num_heads = 2, 8, 32, 4
    mha = MultiHeadAttentionPallas(num_heads, embedding_dim, k_params)

    q = jax.random.normal(k_q, (batch, seq, embedding_dim), jnp.float32)
    k = jax.random.normal(k_k, (batch, seq, embedding_dim), jnp.float32)
    v = jax.random.normal(k_v, (batch, seq, embedding_dim), jnp.float32)

    # Distinct q/k/v activations (grouped QKV projection, separate x tiles).
    out = jax.block_until_ready(mha(q, k, v))
    ref = reference_forward(mha, q, k, v)
    assert out.shape == (batch, seq, embedding_dim)
    assert jnp.allclose(out, ref, atol=1e-3, rtol=1e-3), "mismatch vs reference (qkv)"

    # Self-attention path (shared-activation grouped QKV projection).
    out_sa = jax.block_until_ready(mha(q, q, q))
    ref_sa = reference_forward(mha, q, q, q)
    assert jnp.allclose(out_sa, ref_sa, atol=1e-3, rtol=1e-3), "mismatch vs reference (self)"

    print("KERNEL_OK")
</pallas_src>

<mosaic_0001>
module attributes {stable_mosaic.version = 11 : i64} {
  func.func @_qkv_kernel(%arg0: i32, %arg1: i32, %arg2: i32, %arg3: memref<16x32xf32, #tpu.memory_space<vmem>>, %arg4: memref<16x32xf32, #tpu.memory_space<vmem>>, %arg5: memref<16x32xf32, #tpu.memory_space<vmem>>, %arg6: memref<32x32xf32, #tpu.memory_space<vmem>>, %arg7: memref<32x32xf32, #tpu.memory_space<vmem>>, %arg8: memref<32x32xf32, #tpu.memory_space<vmem>>, %arg9: memref<1x32xf32, #tpu.memory_space<vmem>>, %arg10: memref<1x32xf32, #tpu.memory_space<vmem>>, %arg11: memref<1x32xf32, #tpu.memory_space<vmem>>, %arg12: memref<16x32xf32, #tpu.memory_space<vmem>>, %arg13: memref<16x32xf32, #tpu.memory_space<vmem>>, %arg14: memref<16x32xf32, #tpu.memory_space<vmem>>, %arg15: memref<16x32xf32, #tpu.memory_space<vmem>>, %arg16: memref<16x32xf32, #tpu.memory_space<vmem>>, %arg17: memref<16x32xf32, #tpu.memory_space<vmem>>) attributes {dimension_semantics = [#tpu.dimension_semantics<parallel>, #tpu.dimension_semantics<parallel>, #tpu.dimension_semantics<arbitrary>], iteration_bounds = array<i64: 1, 1, 1>, scalar_prefetch = 0 : i64, scratch_operands = 3 : i64, tpu.core_type = #tpu.core_type<tc>, window_params = [{transform_indices = @transform_0, window_bounds = array<i64: 16, 32>}, {transform_indices = @transform_1, window_bounds = array<i64: 16, 32>}, {transform_indices = @transform_2, window_bounds = array<i64: 16, 32>}, {transform_indices = @transform_3, window_bounds = array<i64: 32, 32>}, {transform_indices = @transform_4, window_bounds = array<i64: 32, 32>}, {transform_indices = @transform_5, window_bounds = array<i64: 32, 32>}, {transform_indices = @transform_6, window_bounds = array<i64: 1, 32>}, {transform_indices = @transform_7, window_bounds = array<i64: 1, 32>}, {transform_indices = @transform_8, window_bounds = array<i64: 1, 32>}, {transform_indices = @transform_9, window_bounds = array<i64: 16, 32>}, {transform_indices = @transform_10, window_bounds = array<i64: 16, 32>}, {transform_indices = @transform_11, window_bounds = array<i64: 16, 32>}]} {
    %c0_i32 = arith.constant 0 : i32
    %0 = arith.cmpi eq, %arg2, %c0_i32 : i32
    %1 = arith.extui %0 : i1 to i32
    %c0_i32_0 = arith.constant 0 : i32
    %2 = arith.cmpi ne, %1, %c0_i32_0 : i32
    scf.if %2 {
      %cst_28 = arith.constant 0.000000e+00 : f32
      %24 = vector.broadcast %cst_28 : f32 to vector<16x32xf32>
      %c0_29 = arith.constant 0 : index
      %c0_30 = arith.constant 0 : index
      %25 = vector.load %arg15[%c0_29, %c0_30] : memref<16x32xf32, #tpu.memory_space<vmem>>, vector<16x32xf32>
      tpu.vector_store %arg15[%c0_29, %c0_30], %24 {strides = array<i32>} : memref<16x32xf32, #tpu.memory_space<vmem>>, vector<16x32xf32>,
      %cst_31 = arith.constant 0.000000e+00 : f32
      %26 = vector.broadcast %cst_31 : f32 to vector<16x32xf32>
      %c0_32 = arith.constant 0 : index
      %c0_33 = arith.constant 0 : index
      %27 = vector.load %arg16[%c0_32, %c0_33] : memref<16x32xf32, #tpu.memory_space<vmem>>, vector<16x32xf32>
      tpu.vector_store %arg16[%c0_32, %c0_33], %26 {strides = array<i32>} : memref<16x32xf32, #tpu.memory_space<vmem>>, vector<16x32xf32>,
      %cst_34 = arith.constant 0.000000e+00 : f32
      %28 = vector.broadcast %cst_34 : f32 to vector<16x32xf32>
      %c0_35 = arith.constant 0 : index
      %c0_36 = arith.constant 0 : index
      %29 = vector.load %arg17[%c0_35, %c0_36] : memref<16x32xf32, #tpu.memory_space<vmem>>, vector<16x32xf32>
      tpu.vector_store %arg17[%c0_35, %c0_36], %28 {strides = array<i32>} : memref<16x32xf32, #tpu.memory_space<vmem>>, vector<16x32xf32>,
    } else {
    }
    %c0 = arith.constant 0 : index
    %c0_1 = arith.constant 0 : index
    %3 = vector.load %arg15[%c0, %c0_1] : memref<16x32xf32, #tpu.memory_space<vmem>>, vector<16x32xf32>
    %c0_2 = arith.constant 0 : index
    %c0_3 = arith.constant 0 : index
    %4 = vector.load %arg3[%c0_2, %c0_3] : memref<16x32xf32, #tpu.memory_space<vmem>>, vector<16x32xf32>
    %c0_4 = arith.constant 0 : index
    %c0_5 = arith.constant 0 : index
    %5 = vector.load %arg6[%c0_4, %c0_5] : memref<32x32xf32, #tpu.memory_space<vmem>>, vector<32x32xf32>
    %cst = arith.constant dense<0.000000e+00> : vector<16x32xf32>
    %6 = tpu.matmul %4, %5, %cst {dimension_numbers = #tpu.dot_dimension_numbers<[1], [0], [0], [1], [0, 0, 1, 1], [], []>} : vector<16x32xf32>, vector<32x32xf32>, vector<16x32xf32> -> vector<16x32xf32>
    %7 = arith.addf %3, %6 : vector<16x32xf32>
    %c0_6 = arith.constant 0 : index
    %c0_7 = arith.constant 0 : index
    %8 = vector.load %arg15[%c0_6, %c0_7] : memref<16x32xf32, #tpu.memory_space<vmem>>, vector<16x32xf32>
    tpu.vector_store %arg15[%c0_6, %c0_7], %7 {strides = array<i32>} : memref<16x32xf32, #tpu.memory_space<vmem>>, vector<16x32xf32>,
    %c0_8 = arith.constant 0 : index
    %c0_9 = arith.constant 0 : index
    %9 = vector.load %arg16[%c0_8, %c0_9] : memref<16x32xf32, #tpu.memory_space<vmem>>, vector<16x32xf32>
    %c0_10 = arith.constant 0 : index
    %c0_11 = arith.constant 0 : index
    %10 = vector.load %arg4[%c0_10, %c0_11] : memref<16x32xf32, #tpu.memory_space<vmem>>, vector<16x32xf32>
    %c0_12 = arith.constant 0 : index
    %c0_13 = arith.constant 0 : index
    %11 = vector.load %arg7[%c0_12, %c0_13] : memref<32x32xf32, #tpu.memory_space<vmem>>, vector<32x32xf32>
    %cst_14 = arith.constant dense<0.000000e+00> : vector<16x32xf32>
    %12 = tpu.matmul %10, %11, %cst_14 {dimension_numbers = #tpu.dot_dimension_numbers<[1], [0], [0], [1], [0, 0, 1, 1], [], []>} : vector<16x32xf32>, vector<32x32xf32>, vector<16x32xf32> -> vector<16x32xf32>
    %13 = arith.addf %9, %12 : vector<16x32xf32>
    %c0_15 = arith.constant 0 : index
    %c0_16 = arith.constant 0 : index
    %14 = vector.load %arg16[%c0_15, %c0_16] : memref<16x32xf32, #tpu.memory_space<vmem>>, vector<16x32xf32>
    tpu.vector_store %arg16[%c0_15, %c0_16], %13 {strides = array<i32>} : memref<16x32xf32, #tpu.memory_space<vmem>>, vector<16x32xf32>,
    %c0_17 = arith.constant 0 : index
    %c0_18 = arith.constant 0 : index
    %15 = vector.load %arg17[%c0_17, %c0_18] : memref<16x32xf32, #tpu.memory_space<vmem>>, vector<16x32xf32>
    %c0_19 = arith.constant 0 : index
    %c0_20 = arith.constant 0 : index
    %16 = vector.load %arg5[%c0_19, %c0_20] : memref<16x32xf32, #tpu.memory_space<vmem>>, vector<16x32xf32>
    %c0_21 = arith.constant 0 : index
    %c0_22 = arith.constant 0 : index
    %17 = vector.load %arg8[%c0_21, %c0_22] : memref<32x32xf32, #tpu.memory_space<vmem>>, vector<32x32xf32>
    %cst_23 = arith.constant dense<0.000000e+00> : vector<16x32xf32>
    %18 = tpu.matmul %16, %17, %cst_23 {dimension_numbers = #tpu.dot_dimension_numbers<[1], [0], [0], [1], [0, 0, 1, 1], [], []>} : vector<16x32xf32>, vector<32x32xf32>, vector<16x32xf32> -> vector<16x32xf32>
    %19 = arith.addf %15, %18 : vector<16x32xf32>
    %c0_24 = arith.constant 0 : index
    %c0_25 = arith.constant 0 : index
    %20 = vector.load %arg17[%c0_24, %c0_25] : memref<16x32xf32, #tpu.memory_space<vmem>>, vector<16x32xf32>
    tpu.vector_store %arg17[%c0_24, %c0_25], %19 {strides = array<i32>} : memref<16x32xf32, #tpu.memory_space<vmem>>, vector<16x32xf32>,
    %c0_i32_26 = arith.constant 0 : i32
    %21 = arith.cmpi eq, %arg2, %c0_i32_26 : i32
    %22 = arith.extui %21 : i1 to i32
    %c0_i32_27 = arith.constant 0 : i32
    %23 = arith.cmpi ne, %22, %c0_i32_27 : i32
    scf.if %23 {
      %c0_28 = arith.constant 0 : index
      %c0_29 = arith.constant 0 : index
      %24 = vector.load %arg15[%c0_28, %c0_29] : memref<16x32xf32, #tpu.memory_space<vmem>>, vector<16x32xf32>
      %c0_30 = arith.constant 0 : index
      %c0_31 = arith.constant 0 : index
      %25 = vector.load %arg9[%c0_30, %c0_31] : memref<1x32xf32, #tpu.memory_space<vmem>>, vector<1x32xf32>
      %26 = vector.broadcast %25 : vector<1x32xf32> to vector<16x32xf32>
      %27 = arith.addf %24, %26 : vector<16x32xf32>
      %c0_32 = arith.constant 0 : index
      %c0_33 = arith.constant 0 : index
      %28 = vector.load %arg12[%c0_32, %c0_33] : memref<16x32xf32, #tpu.memory_space<vmem>>, vector<16x32xf32>
      tpu.vector_store %arg12[%c0_32, %c0_33], %27 {strides = array<i32>} : memref<16x32xf32, #tpu.memory_space<vmem>>, vector<16x32xf32>,
      %c0_34 = arith.constant 0 : index
      %c0_35 = arith.constant 0 : index
      %29 = vector.load %arg16[%c0_34, %c0_35] : memref<16x32xf32, #tpu.memory_space<vmem>>, vector<16x32xf32>
      %c0_36 = arith.constant 0 : index
      %c0_37 = arith.constant 0 : index
      %30 = vector.load %arg10[%c0_36, %c0_37] : memref<1x32xf32, #tpu.memory_space<vmem>>, vector<1x32xf32>
      %31 = vector.broadcast %30 : vector<1x32xf32> to vector<16x32xf32>
      %32 = arith.addf %29, %31 : vector<16x32xf32>
      %c0_38 = arith.constant 0 : index
      %c0_39 = arith.constant 0 : index
      %33 = vector.load %arg13[%c0_38, %c0_39] : memref<16x32xf32, #tpu.memory_space<vmem>>, vector<16x32xf32>
      tpu.vector_store %arg13[%c0_38, %c0_39], %32 {strides = array<i32>} : memref<16x32xf32, #tpu.memory_space<vmem>>, vector<16x32xf32>,
      %c0_40 = arith.constant 0 : index
      %c0_41 = arith.constant 0 : index
      %34 = vector.load %arg17[%c0_40, %c0_41] : memref<16x32xf32, #tpu.memory_space<vmem>>, vector<16x32xf32>
      %c0_42 = arith.constant 0 : index
      %c0_43 = arith.constant 0 : index
      %35 = vector.load %arg11[%c0_42, %c0_43] : memref<1x32xf32, #tpu.memory_space<vmem>>, vector<1x32xf32>
      %36 = vector.broadcast %35 : vector<1x32xf32> to vector<16x32xf32>
      %37 = arith.addf %34, %36 : vector<16x32xf32>
      %c0_44 = arith.constant 0 : index
      %c0_45 = arith.constant 0 : index
      %38 = vector.load %arg14[%c0_44, %c0_45] : memref<16x32xf32, #tpu.memory_space<vmem>>, vector<16x32xf32>
      tpu.vector_store %arg14[%c0_44, %c0_45], %37 {strides = array<i32>} : memref<16x32xf32, #tpu.memory_space<vmem>>, vector<16x32xf32>,
    } else {
    }
    return
  }
  func.func @transform_0(%arg0: i32, %arg1: i32, %arg2: i32) -> (i32, i32) {
    %c0_i32 = arith.constant 0 : i32
    return %arg0, %arg2 : i32, i32
  }
  func.func @transform_1(%arg0: i32, %arg1: i32, %arg2: i32) -> (i32, i32) {
    %c0_i32 = arith.constant 0 : i32
    return %arg0, %arg2 : i32, i32
  }
  func.func @transform_2(%arg0: i32, %arg1: i32, %arg2: i32) -> (i32, i32) {
    %c0_i32 = arith.constant 0 : i32
    return %arg0, %arg2 : i32, i32
  }
  func.func @transform_3(%arg0: i32, %arg1: i32, %arg2: i32) -> (i32, i32) {
    %c0_i32 = arith.constant 0 : i32
    return %arg2, %arg1 : i32, i32
  }
  func.func @transform_4(%arg0: i32, %arg1: i32, %arg2: i32) -> (i32, i32) {
    %c0_i32 = arith.constant 0 : i32
    return %arg2, %arg1 : i32, i32
  }
  func.func @transform_5(%arg0: i32, %arg1: i32, %arg2: i32) -> (i32, i32) {
    %c0_i32 = arith.constant 0 : i32
    return %arg2, %arg1 : i32, i32
  }
  func.func @transform_6(%arg0: i32, %arg1: i32, %arg2: i32) -> (i32, i32) {
    %c0_i32 = arith.constant 0 : i32
    %c0_i32_0 = arith.constant 0 : i32
    return %c0_i32, %arg1 : i32, i32
  }
  func.func @transform_7(%arg0: i32, %arg1: i32, %arg2: i32) -> (i32, i32) {
    %c0_i32 = arith.constant 0 : i32
    %c0_i32_0 = arith.constant 0 : i32
    return %c0_i32, %arg1 : i32, i32
  }
  func.func @transform_8(%arg0: i32, %arg1: i32, %arg2: i32) -> (i32, i32) {
    %c0_i32 = arith.constant 0 : i32
    %c0_i32_0 = arith.constant 0 : i32
    return %c0_i32, %arg1 : i32, i32
  }
  func.func @transform_9(%arg0: i32, %arg1: i32, %arg2: i32) -> (i32, i32) {
    %c0_i32 = arith.constant 0 : i32
    return %arg0, %arg1 : i32, i32
  }
  func.func @transform_10(%arg0: i32, %arg1: i32, %arg2: i32) -> (i32, i32) {
    %c0_i32 = arith.constant 0 : i32
    return %arg0, %arg1 : i32, i32
  }
  func.func @transform_11(%arg0: i32, %arg1: i32, %arg2: i32) -> (i32, i32) {
    %c0_i32 = arith.constant 0 : i32
    return %arg0, %arg1 : i32, i32
  }
}

</mosaic_0001>

<llo_original>
// kernel: tpu_custom_call.1
$region0: #{tpu_custom_call.1}
  #allocation0 [shape = 'u32[]', space=smem, size = 0x4, offset = 0x4, fixed_abs, tag = 'smem constant byte address 0x4 - core index']
  #allocation1 [shape = 'u32[144,128]{1,0:T(1,128)}', space=vmem, size = 0x12000, scoped, tag = 'internal scratch']
  #allocation2 [shape = 'f32[16,32]{1,0:T(8,128)}', space=vmem, size = 0x2000, scoped, tag = 'scratch operand']
  #allocation3 [shape = 'f32[16,32]{1,0:T(8,128)}', space=vmem, size = 0x2000, scoped, tag = 'scratch operand']
  #allocation4 [shape = 'f32[16,32]{1,0:T(8,128)}', space=vmem, size = 0x2000, scoped, tag = 'scratch operand']
  %s0 = inlined_call_operand.hbm [shape: f32[16,32], index: 0, kind: input, shape index: {}]
  %s1 = inlined_call_operand.hbm [shape: f32[16,32], index: 1, kind: input, shape index: {}]
  %s2 = inlined_call_operand.hbm [shape: f32[16,32], index: 2, kind: input, shape index: {}]
  %s3 = inlined_call_operand.hbm [shape: f32[32,32], index: 3, kind: input, shape index: {}]
  %s4 = inlined_call_operand.hbm [shape: f32[32,32], index: 4, kind: input, shape index: {}]
  %s5 = inlined_call_operand.hbm [shape: f32[32,32], index: 5, kind: input, shape index: {}]
  %s6 = inlined_call_operand.vmem [shape: f32[1,32], index: 6, kind: input, shape index: {}]
  %s7 = inlined_call_operand.vmem [shape: f32[1,32], index: 7, kind: input, shape index: {}]
  %s8 = inlined_call_operand.vmem [shape: f32[1,32], index: 8, kind: input, shape index: {}]
  %s9 = inlined_call_operand.hbm [shape: f32[16,32], index: 9, kind: output, shape index: {0}]
  %s10 = inlined_call_operand.hbm [shape: f32[16,32], index: 10, kind: output, shape index: {1}]
  %s11 = inlined_call_operand.hbm [shape: f32[16,32], index: 11, kind: output, shape index: {2}]
  %12 = xla_tuple %s9, %s10, %s11
  %s13 = sld [smem:[#allocation0]]
  $region94: #{tpu_custom_call.1} parent=0
    _
  %s15 = ssub.s32 1, %s13
  %s16 = scalar_select 0, %s15, %s13
  $region1: #{tpu_custom_call.1} parent=0
    #allocation5 [shape = 'u8[8192]{0}', space=vmem, size = 0x2000, scoped, tag = 'input window, operand 0, single buffered']
    #allocation6 [shape = 's32[1]{0}', space=sflag, size = 0x4, scoped, tag = 'scoped memory for tpu_custom_call.1']
    #allocation7 [shape = 's32[1]{0}', space=sflag, size = 0x4, scoped, tag = 'scoped memory for tpu_custom_call.1']
    #allocation8 [shape = 'u8[8192]{0}', space=vmem, size = 0x2000, scoped, tag = 'input window, operand 1, single buffered']
    #allocation9 [shape = 's32[1]{0}', space=sflag, size = 0x4, scoped, tag = 'scoped memory for tpu_custom_call.1']
    #allocation10 [shape = 'u8[8192]{0}', space=vmem, size = 0x2000, scoped, tag = 'input window, operand 2, single buffered']
    #allocation11 [shape = 'u8[16384]{0}', space=vmem, size = 0x4000, scoped, tag = 'input window, operand 3, single buffered']
    #allocation12 [shape = 's32[1]{0}', space=sflag, size = 0x4, scoped, tag = 'scoped memory for tpu_custom_call.1']
    #allocation13 [shape = 'u8[16384]{0}', space=vmem, size = 0x4000, scoped, tag = 'input window, operand 4, single buffered']
    #allocation14 [shape = 'u8[16384]{0}', space=vmem, size = 0x4000, scoped, tag = 'input window, operand 5, single buffered']
    #allocation15 [shape = 's32[1]{0}', space=sflag, size = 0x4, scoped, tag = 'scoped memory for tpu_custom_call.1']
    #allocation16 [shape = 'u8[8192]{0}', space=vmem, size = 0x2000, scoped, tag = 'output window, operand 0, single buffered']
    #allocation17 [shape = 'u8[8192]{0}', space=vmem, size = 0x2000, scoped, tag = 'output window, operand 1, single buffered']
    #allocation18 [shape = 's32[1]{0}', space=sflag, size = 0x4, scoped, tag = 'scoped memory for tpu_custom_call.1']
    #allocation19 [shape = 'u8[8192]{0}', space=vmem, size = 0x2000, scoped, tag = 'output window, operand 2, single buffered']
    %17 = vsyncpa [#allocation6], 0
    %18 = vsyncpa [#allocation9], 0
    %19 = vsyncpa [#allocation12], 0
    %20 = vsyncpa [#allocation15], 0
    %21 = vsyncpa [#allocation7], 0
    %22 = vsyncpa [#allocation18], 0
    // Predicated region
    $region2: #{tpu_custom_call.1} parent=1 // pred_check
      _
    $region3: #{tpu_custom_call.1} parent=1 // pred_check_branch
      %24 = sbr.rel (0) target = $region5
    $region4: #{tpu_custom_call.1} parent=1 // pred_region
      %s26 = ssub.s32 256, 256
      %27 = vsyncadd [#allocation6], %s26
      %s28 = sshll.u32 [#allocation5], 4
      %s29 = int_to_ptr.vmem [resolvable:$true] %s28
      %34 = dma.hbm_to_vmem [thread:$0]  %s0, 256, %s29, [#allocation6], 128, 128, 8
    $region5: #{tpu_custom_call.1} parent=1 // pred_fallthru
      _
    // Predicated region
    $region6: #{tpu_custom_call.1} parent=1 // pred_check
      _
    $region7: #{tpu_custom_call.1} parent=1 // pred_check_branch
      %36 = sbr.rel (0) target = $region9
    $region8: #{tpu_custom_call.1} parent=1 // pred_region
      %s38 = ssub.s32 256, 256
      %39 = vsyncadd [#allocation9], %s38
      %s40 = sshll.u32 [#allocation8], 4
      %s41 = int_to_ptr.vmem [resolvable:$true] %s40
      %46 = dma.hbm_to_vmem [thread:$0]  %s1, 256, %s41, [#allocation9], 128, 128, 8
    $region9: #{tpu_custom_call.1} parent=1 // pred_fallthru
      _
    // Predicated region
    $region10: #{tpu_custom_call.1} parent=1 // pred_check
      _
    $region11: #{tpu_custom_call.1} parent=1 // pred_check_branch
      %48 = sbr.rel (0) target = $region13
    $region12: #{tpu_custom_call.1} parent=1 // pred_region
      %s50 = ssub.s32 256, 256
      %51 = vsyncadd [#allocation9], %s50
      %s52 = sshll.u32 [#allocation10], 4
      %s53 = int_to_ptr.vmem [resolvable:$true] %s52
      %58 = dma.hbm_to_vmem [thread:$0]  %s2, 256, %s53, [#allocation9], 128, 128, 8
    $region13: #{tpu_custom_call.1} parent=1 // pred_fallthru
      _
    // Predicated region
    $region14: #{tpu_custom_call.1} parent=1 // pred_check
      _
    $region15: #{tpu_custom_call.1} parent=1 // pred_check_branch
      %60 = sbr.rel (0) target = $region17
    $region16: #{tpu_custom_call.1} parent=1 // pred_region
      %s62 = ssub.s32 512, 512
      %63 = vsyncadd [#allocation12], %s62
      %s64 = sshll.u32 [#allocation11], 4
      %s65 = int_to_ptr.vmem [resolvable:$true] %s64
      %70 = dma.hbm_to_vmem [thread:$0]  %s3, 512, %s65, [#allocation12], 128, 128, 8
    $region17: #{tpu_custom_call.1} parent=1 // pred_fallthru
      _
    // Predicated region
    $region18: #{tpu_custom_call.1} parent=1 // pred_check
      _
    $region19: #{tpu_custom_call.1} parent=1 // pred_check_branch
      %72 = sbr.rel (0) target = $region21
    $region20: #{tpu_custom_call.1} parent=1 // pred_region
      %s74 = ssub.s32 512, 512
      %75 = vsyncadd [#allocation12], %s74
      %s76 = sshll.u32 [#allocation13], 4
      %s77 = int_to_ptr.vmem [resolvable:$true] %s76
      %82 = dma.hbm_to_vmem [thread:$0]  %s4, 512, %s77, [#allocation12], 128, 128, 8
    $region21: #{tpu_custom_call.1} parent=1 // pred_fallthru
      _
    // Predicated region
    $region22: #{tpu_custom_call.1} parent=1 // pred_check
      _
    $region23: #{tpu_custom_call.1} parent=1 // pred_check_branch
      %84 = sbr.rel (0) target = $region25
    $region24: #{tpu_custom_call.1} parent=1 // pred_region
      %s86 = ssub.s32 512, 512
      %87 = vsyncadd [#allocation15], %s86
      %s88 = sshll.u32 [#allocation14], 4
      %s89 = int_to_ptr.vmem [resolvable:$true] %s88
      %94 = dma.hbm_to_vmem [thread:$0]  %s5, 512, %s89, [#allocation15], 128, 128, 8
    $region25: #{tpu_custom_call.1} parent=1 // pred_fallthru
      _
    // Predicated region
    $region26: #{tpu_custom_call.1} parent=1 // pred_check
      _
    $region27: #{tpu_custom_call.1} parent=1 // pred_check_branch
      %96 = sbr.rel (0) target = $region29
    $region28: #{tpu_custom_call.1} parent=1 // pred_region
      _
    $region29: #{tpu_custom_call.1} parent=1 // pred_fallthru
      _
    // Predicated region
    $region30: #{tpu_custom_call.1} parent=1 // pred_check
      _
    $region31: #{tpu_custom_call.1} parent=1 // pred_check_branch
      %98 = sbr.rel (0) target = $region33
    $region32: #{tpu_custom_call.1} parent=1 // pred_region
      _
    $region33: #{tpu_custom_call.1} parent=1 // pred_fallthru
      _
    // Predicated region
    $region34: #{tpu_custom_call.1} parent=1 // pred_check
      _
    $region35: #{tpu_custom_call.1} parent=1 // pred_check_branch
      %100 = sbr.rel (0) target = $region37
    $region36: #{tpu_custom_call.1} parent=1 // pred_region
      _
    $region37: #{tpu_custom_call.1} parent=1 // pred_fallthru
      _
    // Predicated region
    $region38: #{tpu_custom_call.1} parent=1 // pred_check
      _
    $region39: #{tpu_custom_call.1} parent=1 // pred_check_branch
      %102 = sbr.rel (0) target = $region41
    $region40: #{tpu_custom_call.1} parent=1 // pred_region
      %103 = dma.done [#allocation6], 256
    $region41: #{tpu_custom_call.1} parent=1 // pred_fallthru
      _
    // Predicated region
    $region42: #{tpu_custom_call.1} parent=1 // pred_check
      _
    $region43: #{tpu_custom_call.1} parent=1 // pred_check_branch
      %105 = sbr.rel (0) target = $region45
    $region44: #{tpu_custom_call.1} parent=1 // pred_region
      %106 = dma.done [#allocation9], 256
    $region45: #{tpu_custom_call.1} parent=1 // pred_fallthru
      _
    // Predicated region
    $region46: #{tpu_custom_call.1} parent=1 // pred_check
      _
    $region47: #{tpu_custom_call.1} parent=1 // pred_check_branch
      %108 = sbr.rel (0) target = $region49
    $region48: #{tpu_custom_call.1} parent=1 // pred_region
      %109 = dma.done [#allocation9], 256
    $region49: #{tpu_custom_call.1} parent=1 // pred_fallthru
      _
    // Predicated region
    $region50: #{tpu_custom_call.1} parent=1 // pred_check
      _
    $region51: #{tpu_custom_call.1} parent=1 // pred_check_branch
      %111 = sbr.rel (0) target = $region53
    $region52: #{tpu_custom_call.1} parent=1 // pred_region
      %112 = dma.done [#allocation12], 512
    $region53: #{tpu_custom_call.1} parent=1 // pred_fallthru
      _
    // Predicated region
    $region54: #{tpu_custom_call.1} parent=1 // pred_check
      _
    $region55: #{tpu_custom_call.1} parent=1 // pred_check_branch
      %114 = sbr.rel (0) target = $region57
    $region56: #{tpu_custom_call.1} parent=1 // pred_region
      %115 = dma.done [#allocation12], 512
    $region57: #{tpu_custom_call.1} parent=1 // pred_fallthru
      _
    // Predicated region
    $region58: #{tpu_custom_call.1} parent=1 // pred_check
      _
    $region59: #{tpu_custom_call.1} parent=1 // pred_check_branch
      %117 = sbr.rel (0) target = $region61
    $region60: #{tpu_custom_call.1} parent=1 // pred_region
      %118 = dma.done [#allocation15], 512
    $region61: #{tpu_custom_call.1} parent=1 // pred_fallthru
      _
    %p119 = scmp.eq.s32.totalorder 0, 0
    // Predicated region
    $region62: #{tpu_custom_call.1} parent=1 // pred_check
      %p120 = pneg %p119
    $region63: #{tpu_custom_call.1} parent=1 // pred_check_branch
      %122 = sbr.rel (%p120) target = $region65
    $region64: #{tpu_custom_call.1} parent=1 // pred_region
      %vm123 = vcmask 261120
      %124 = vst.msk [vmem:[#allocation2] sm:$0xff] %vm123, 0.0
      %125 = vst.msk [vmem:[#allocation2 + $0x8] sm:$0xff] %vm123, 0.0
      %126 = vst.msk [vmem:[#allocation3] sm:$0xff] %vm123, 0.0
      %127 = vst.msk [vmem:[#allocation3 + $0x8] sm:$0xff] %vm123, 0.0
      %128 = vst.msk [vmem:[#allocation4] sm:$0xff] %vm123, 0.0
      %129 = vst.msk [vmem:[#allocation4 + $0x8] sm:$0xff] %vm123, 0.0
    $region65: #{tpu_custom_call.1} parent=1 // pred_fallthru
      _
    %v130 = vld [vmem:[#allocation2] sm:$0xff]
    %v131 = vld [vmem:[#allocation2 + $0x8] sm:$0xff]
    %v132 = vld [vmem:[#allocation5] sm:$0xff]
    %v133 = vld [vmem:[#allocation5 + $0x8] sm:$0xff]
    %v134 = vld [vmem:[#allocation11] sm:$0xff]
    %v135 = vld [vmem:[#allocation11 + $0x8] sm:$0xff]
    %v136 = vld [vmem:[#allocation11 + $0x10] sm:$0xff]
    %v137 = vld [vmem:[#allocation11 + $0x18] sm:$0xff]
    %vm138 = vcmask 261120
    %v140 = vsel %vm138, %v132, 0
    %v143 = vsel %vm138, %v133, 0
    %145 = vmatprep.subr.mxu0 0.0
    %146 = vmatpush1.msra.mxu0 %v134
    %147 = vmatprep.subr.mxu0 0.0
    %148 = vmatpush1.msra.mxu0 %v135
    %149 = vmatprep.subr.mxu0 0.0
    %150 = vmatpush1.msra.mxu0 %v136
    %151 = vmatprep.subr.mxu0 0.0
    %152 = vmatpush1.msra.mxu0 %v137
    %153 = vmatprep.subr.mxu0 0.0
    %154 = vmatpush1.msra.mxu0 0.0
    %155 = vmatprep.subr.mxu0 0.0
    %156 = vmatpush1.msra.mxu0 0.0
    %157 = vmatprep.subr.mxu0 0.0
    %158 = vmatpush1.msra.mxu0 0.0
    %159 = vmatprep.subr.mxu0 0.0
    %160 = vmatpush1.msra.mxu0 0.0
    %161 = vmatprep.subr.mxu0 0.0
    %162 = vmatpush1.msra.mxu0 0.0
    %163 = vmatprep.subr.mxu0 0.0
    %164 = vmatpush1.msra.mxu0 0.0
    %165 = vmatprep.subr.mxu0 0.0
    %166 = vmatpush1.msra.mxu0 0.0
    %167 = vmatprep.subr.mxu0 0.0
    %168 = vmatpush1.msra.mxu0 0.0
    %169 = vmatprep.subr.mxu0 0.0
    %170 = vmatpush1.msra.mxu0 0.0
    %171 = vmatprep.subr.mxu0 0.0
    %172 = vmatpush1.msra.mxu0 0.0
    %173 = vmatprep.subr.mxu0 0.0
    %174 = vmatpush1.msra.mxu0 0.0
    %175 = vmatprep.subr.mxu0 0.0
    %176 = vmatpush1.msra.mxu0 0.0
    %177 = vmatprep.subr.mxu0 0.0
    %178 = vmatpush1.msra.mxu0 0.0
    %179 = vmatprep.subr.mxu0 0.0
    %180 = vmatpush1.msra.mxu0 0.0
    %181 = vmatprep.subr.mxu0 0.0
    %182 = vmatpush1.msra.mxu0 0.0
    %183 = vmatprep.subr.mxu0 0.0
    %184 = vmatpush1.msra.mxu0 0.0
    %185 = vmatprep.subr.mxu0 0.0
    %186 = vmatpush1.msra.mxu0 0.0
    %187 = vmatprep.subr.mxu0 0.0
    %188 = vmatpush1.msra.mxu0 0.0
    %189 = vmatprep.subr.mxu0 0.0
    %190 = vmatpush1.msra.mxu0 0.0
    %191 = vmatprep.subr.mxu0 0.0
    %192 = vmatpush1.msra.mxu0 0.0
    %193 = vmatprep.subr.mxu0 0.0
    %194 = vmatpush1.msra.mxu0 0.0
    %195 = vmatprep.subr.mxu0 0.0
    %196 = vmatpush1.msra.mxu0 0.0
    %197 = vmatprep.subr.mxu0 0.0
    %198 = vmatpush1.msra.mxu0 0.0
    %199 = vmatprep.subr.mxu0 0.0
    %200 = vmatpush1.msra.mxu0 0.0
    %201 = vmatprep.subr.mxu0 0.0
    %202 = vmatpush1.msra.mxu0 0.0
    %203 = vmatprep.subr.mxu0 0.0
    %204 = vmatpush1.msra.mxu0 0.0
    %205 = vmatprep.subr.mxu0 0.0
    %206 = vmatpush1.msra.mxu0 0.0
    %207 = vmatprep.subr.mxu0 0.0
    %208 = vmatpush1.msra.mxu0 0.0
    %209 = vmatprep.mubr.f32.mxu0 0.0
    %210 = vmatmul.mubr.f32.gmra.mrb[0].mxu0 %v140
    %v211 = vpop.f32.mrb[0].mxu0
    %v212 = vadd.f32 0.0, %v211
    %v213 = vpop.f32.mrb[0].mxu0
    %214 = vmatprep.mubr.f32.mxu0 0.0
    %215 = vmatmul.mubr.f32.gmra.mrb[0].mxu0 %v143
    %v216 = vpop.f32.mrb[0].mxu0
    %v217 = vadd.f32 0.0, %v216
    %v218 = vpop.f32.mrb[0].mxu0
    %219 = vdwg.mxu0
    %v220 = vadd.f32 %v130, %v212
    %v221 = vadd.f32 %v131, %v217
    %222 = vst.msk [vmem:[#allocation2] sm:$0xff] %vm138, %v220
    %223 = vst.msk [vmem:[#allocation2 + $0x8] sm:$0xff] %vm138, %v221
    %v224 = vld [vmem:[#allocation3] sm:$0xff]
    %v225 = vld [vmem:[#allocation3 + $0x8] sm:$0xff]
    %v226 = vld [vmem:[#allocation8] sm:$0xff]
    %v227 = vld [vmem:[#allocation8 + $0x8] sm:$0xff]
    %v228 = vld [vmem:[#allocation13] sm:$0xff]
    %v229 = vld [vmem:[#allocation13 + $0x8] sm:$0xff]
    %v230 = vld [vmem:[#allocation13 + $0x10] sm:$0xff]
    %v231 = vld [vmem:[#allocation13 + $0x18] sm:$0xff]
    %v233 = vsel %vm138, %v226, 0
    %v236 = vsel %vm138, %v227, 0
    %238 = vmatprep.subr.mxu0 0.0
    %239 = vmatpush1.msra.mxu0 %v228
    %240 = vmatprep.subr.mxu0 0.0
    %241 = vmatpush1.msra.mxu0 %v229
    %242 = vmatprep.subr.mxu0 0.0
    %243 = vmatpush1.msra.mxu0 %v230
    %244 = vmatprep.subr.mxu0 0.0
    %245 = vmatpush1.msra.mxu0 %v231
    %246 = vmatprep.subr.mxu0 0.0
    %247 = vmatpush1.msra.mxu0 0.0
    %248 = vmatprep.subr.mxu0 0.0
    %249 = vmatpush1.msra.mxu0 0.0
    %250 = vmatprep.subr.mxu0 0.0
    %251 = vmatpush1.msra.mxu0 0.0
    %252 = vmatprep.subr.mxu0 0.0
    %253 = vmatpush1.msra.mxu0 0.0
    %254 = vmatprep.subr.mxu0 0.0
    %255 = vmatpush1.msra.mxu0 0.0
    %256 = vmatprep.subr.mxu0 0.0
    %257 = vmatpush1.msra.mxu0 0.0
    %258 = vmatprep.subr.mxu0 0.0
    %259 = vmatpush1.msra.mxu0 0.0
    %260 = vmatprep.subr.mxu0 0.0
    %261 = vmatpush1.msra.mxu0 0.0
    %262 = vmatprep.subr.mxu0 0.0
    %263 = vmatpush1.msra.mxu0 0.0
    %264 = vmatprep.subr.mxu0 0.0
    %265 = vmatpush1.msra.mxu0 0.0
    %266 = vmatprep.subr.mxu0 0.0
    %267 = vmatpush1.msra.mxu0 0.0
    %268 = vmatprep.subr.mxu0 0.0
    %269 = vmatpush1.msra.mxu0 0.0
    %270 = vmatprep.subr.mxu0 0.0
    %271 = vmatpush1.msra.mxu0 0.0
    %272 = vmatprep.subr.mxu0 0.0
    %273 = vmatpush1.msra.mxu0 0.0
    %274 = vmatprep.subr.mxu0 0.0
    %275 = vmatpush1.msra.mxu0 0.0
    %276 = vmatprep.subr.mxu0 0.0
    %277 = vmatpush1.msra.mxu0 0.0
    %278 = vmatprep.subr.mxu0 0.0
    %279 = vmatpush1.msra.mxu0 0.0
    %280 = vmatprep.subr.mxu0 0.0
    %281 = vmatpush1.msra.mxu0 0.0
    %282 = vmatprep.subr.mxu0 0.0
    %283 = vmatpush1.msra.mxu0 0.0
    %284 = vmatprep.subr.mxu0 0.0
    %285 = vmatpush1.msra.mxu0 0.0
    %286 = vmatprep.subr.mxu0 0.0
    %287 = vmatpush1.msra.mxu0 0.0
    %288 = vmatprep.subr.mxu0 0.0
    %289 = vmatpush1.msra.mxu0 0.0
    %290 = vmatprep.subr.mxu0 0.0
    %291 = vmatpush1.msra.mxu0 0.0
    %292 = vmatprep.subr.mxu0 0.0
    %293 = vmatpush1.msra.mxu0 0.0
    %294 = vmatprep.subr.mxu0 0.0
    %295 = vmatpush1.msra.mxu0 0.0
    %296 = vmatprep.subr.mxu0 0.0
    %297 = vmatpush1.msra.mxu0 0.0
    %298 = vmatprep.subr.mxu0 0.0
    %299 = vmatpush1.msra.mxu0 0.0
    %300 = vmatprep.subr.mxu0 0.0
    %301 = vmatpush1.msra.mxu0 0.0
    %302 = vmatprep.mubr.f32.mxu0 0.0
    %303 = vmatmul.mubr.f32.gmra.mrb[0].mxu0 %v233
    %v304 = vpop.f32.mrb[0].mxu0
    %v305 = vadd.f32 0.0, %v304
    %v306 = vpop.f32.mrb[0].mxu0
    %307 = vmatprep.mubr.f32.mxu0 0.0
    %308 = vmatmul.mubr.f32.gmra.mrb[0].mxu0 %v236
    %v309 = vpop.f32.mrb[0].mxu0
    %v310 = vadd.f32 0.0, %v309
    %v311 = vpop.f32.mrb[0].mxu0
    %312 = vdwg.mxu0
    %v313 = vadd.f32 %v224, %v305
    %v314 = vadd.f32 %v225, %v310
    %315 = vst.msk [vmem:[#allocation3] sm:$0xff] %vm138, %v313
    %316 = vst.msk [vmem:[#allocation3 + $0x8] sm:$0xff] %vm138, %v314
    %v317 = vld [vmem:[#allocation4] sm:$0xff]
    %v318 = vld [vmem:[#allocation4 + $0x8] sm:$0xff]
    %v319 = vld [vmem:[#allocation10] sm:$0xff]
    %v320 = vld [vmem:[#allocation10 + $0x8] sm:$0xff]
    %v321 = vld [vmem:[#allocation14] sm:$0xff]
    %v322 = vld [vmem:[#allocation14 + $0x8] sm:$0xff]
    %v323 = vld [vmem:[#allocation14 + $0x10] sm:$0xff]
    %v324 = vld [vmem:[#allocation14 + $0x18] sm:$0xff]
    %v326 = vsel %vm138, %v319, 0
    %v329 = vsel %vm138, %v320, 0
    %331 = vmatprep.subr.mxu0 0.0
    %332 = vmatpush1.msra.mxu0 %v321
    %333 = vmatprep.subr.mxu0 0.0
    %334 = vmatpush1.msra.mxu0 %v322
    %335 = vmatprep.subr.mxu0 0.0
    %336 = vmatpush1.msra.mxu0 %v323
    %337 = vmatprep.subr.mxu0 0.0
    %338 = vmatpush1.msra.mxu0 %v324
    %339 = vmatprep.subr.mxu0 0.0
    %340 = vmatpush1.msra.mxu0 0.0
    %341 = vmatprep.subr.mxu0 0.0
    %342 = vmatpush1.msra.mxu0 0.0
    %343 = vmatprep.subr.mxu0 0.0
    %344 = vmatpush1.msra.mxu0 0.0
    %345 = vmatprep.subr.mxu0 0.0
    %346 = vmatpush1.msra.mxu0 0.0
    %347 = vmatprep.subr.mxu0 0.0
    %348 = vmatpush1.msra.mxu0 0.0
    %349 = vmatprep.subr.mxu0 0.0
    %350 = vmatpush1.msra.mxu0 0.0
    %351 = vmatprep.subr.mxu0 0.0
    %352 = vmatpush1.msra.mxu0 0.0
    %353 = vmatprep.subr.mxu0 0.0
    %354 = vmatpush1.msra.mxu0 0.0
    %355 = vmatprep.subr.mxu0 0.0
    %356 = vmatpush1.msra.mxu0 0.0
    %357 = vmatprep.subr.mxu0 0.0
    %358 = vmatpush1.msra.mxu0 0.0
    %359 = vmatprep.subr.mxu0 0.0
    %360 = vmatpush1.msra.mxu0 0.0
    %361 = vmatprep.subr.mxu0 0.0
    %362 = vmatpush1.msra.mxu0 0.0
    %363 = vmatprep.subr.mxu0 0.0
    %364 = vmatpush1.msra.mxu0 0.0
    %365 = vmatprep.subr.mxu0 0.0
    %366 = vmatpush1.msra.mxu0 0.0
    %367 = vmatprep.subr.mxu0 0.0
    %368 = vmatpush1.msra.mxu0 0.0
    %369 = vmatprep.subr.mxu0 0.0
    %370 = vmatpush1.msra.mxu0 0.0
    %371 = vmatprep.subr.mxu0 0.0
    %372 = vmatpush1.msra.mxu0 0.0
    %373 = vmatprep.subr.mxu0 0.0
    %374 = vmatpush1.msra.mxu0 0.0
    %375 = vmatprep.subr.mxu0 0.0
    %376 = vmatpush1.msra.mxu0 0.0
    %377 = vmatprep.subr.mxu0 0.0
    %378 = vmatpush1.msra.mxu0 0.0
    %379 = vmatprep.subr.mxu0 0.0
    %380 = vmatpush1.msra.mxu0 0.0
    %381 = vmatprep.subr.mxu0 0.0
    %382 = vmatpush1.msra.mxu0 0.0
    %383 = vmatprep.subr.mxu0 0.0
    %384 = vmatpush1.msra.mxu0 0.0
    %385 = vmatprep.subr.mxu0 0.0
    %386 = vmatpush1.msra.mxu0 0.0
    %387 = vmatprep.subr.mxu0 0.0
    %388 = vmatpush1.msra.mxu0 0.0
    %389 = vmatprep.subr.mxu0 0.0
    %390 = vmatpush1.msra.mxu0 0.0
    %391 = vmatprep.subr.mxu0 0.0
    %392 = vmatpush1.msra.mxu0 0.0
    %393 = vmatprep.subr.mxu0 0.0
    %394 = vmatpush1.msra.mxu0 0.0
    %395 = vmatprep.mubr.f32.mxu0 0.0
    %396 = vmatmul.mubr.f32.gmra.mrb[0].mxu0 %v326
    %v397 = vpop.f32.mrb[0].mxu0
    %v398 = vadd.f32 0.0, %v397
    %v399 = vpop.f32.mrb[0].mxu0
    %400 = vmatprep.mubr.f32.mxu0 0.0
    %401 = vmatmul.mubr.f32.gmra.mrb[0].mxu0 %v329
    %v402 = vpop.f32.mrb[0].mxu0
    %v403 = vadd.f32 0.0, %v402
    %v404 = vpop.f32.mrb[0].mxu0
    %405 = vdwg.mxu0
    %v406 = vadd.f32 %v317, %v398
    %v407 = vadd.f32 %v318, %v403
    %408 = vst.msk [vmem:[#allocation4] sm:$0xff] %vm138, %v406
    %409 = vst.msk [vmem:[#allocation4 + $0x8] sm:$0xff] %vm138, %v407
    // Predicated region
    $region66: #{tpu_custom_call.1} parent=1 // pred_check
      %p410 = pneg %p119
    $region67: #{tpu_custom_call.1} parent=1 // pred_check_branch
      %412 = sbr.rel (%p410) target = $region69
    $region68: #{tpu_custom_call.1} parent=1 // pred_region
      %v413 = vld [vmem:[#allocation2] sm:$0xff]
      %v414 = vld [vmem:[#allocation2 + $0x8] sm:$0xff]
      %v415 = vld [vmem:[%s6] sm:$0x1]
      %v417 = vlaneseq
      %v418 = vshrl.u32 %v417, 7
      %v419 = vsub.s32 0, %v418
      %v420 = vrot.slane %v415, %v419
      %v422 = vadd.f32 %v413, %v420
      %v423 = vadd.f32 %v414, %v420
      %424 = vst.msk [vmem:[#allocation16] sm:$0xff] %vm138, %v422
      %425 = vst.msk [vmem:[#allocation16 + $0x8] sm:$0xff] %vm138, %v423
      %v426 = vld [vmem:[#allocation3] sm:$0xff]
      %v427 = vld [vmem:[#allocation3 + $0x8] sm:$0xff]
      %v428 = vld [vmem:[%s7] sm:$0x1]
      %v430 = vlaneseq
      %v431 = vshrl.u32 %v430, 7
      %v432 = vsub.s32 0, %v431
      %v433 = vrot.slane %v428, %v432
      %v435 = vadd.f32 %v426, %v433
      %v436 = vadd.f32 %v427, %v433
      %437 = vst.msk [vmem:[#allocation17] sm:$0xff] %vm138, %v435
      %438 = vst.msk [vmem:[#allocation17 + $0x8] sm:$0xff] %vm138, %v436
      %v439 = vld [vmem:[#allocation4] sm:$0xff]
      %v440 = vld [vmem:[#allocation4 + $0x8] sm:$0xff]
      %v441 = vld [vmem:[%s8] sm:$0x1]
      %v443 = vlaneseq
      %v444 = vshrl.u32 %v443, 7
      %v445 = vsub.s32 0, %v444
      %v446 = vrot.slane %v441, %v445
      %v448 = vadd.f32 %v439, %v446
      %v449 = vadd.f32 %v440, %v446
      %450 = vst.msk [vmem:[#allocation19] sm:$0xff] %vm138, %v448
      %451 = vst.msk [vmem:[#allocation19 + $0x8] sm:$0xff] %vm138, %v449
    $region69: #{tpu_custom_call.1} parent=1 // pred_fallthru
      _
    // Predicated region
    $region70: #{tpu_custom_call.1} parent=1 // pred_check
      _
    $region71: #{tpu_custom_call.1} parent=1 // pred_check_branch
      %453 = sbr.rel (0) target = $region73
    $region72: #{tpu_custom_call.1} parent=1 // pred_region
      %s455 = ssub.s32 256, 256
      %456 = vsyncadd [#allocation7], %s455
      %s457 = sshll.u32 [#allocation16], 4
      %s458 = int_to_ptr.vmem [resolvable:$true] %s457
      %463 = dma.vmem_to_hbm [thread:$0]  %s458, 256, %s9, [#allocation7], 128, 128, 8
    $region73: #{tpu_custom_call.1} parent=1 // pred_fallthru
      _
    // Predicated region
    $region74: #{tpu_custom_call.1} parent=1 // pred_check
      _
    $region75: #{tpu_custom_call.1} parent=1 // pred_check_branch
      %465 = sbr.rel (0) target = $region77
    $region76: #{tpu_custom_call.1} parent=1 // pred_region
      %s467 = ssub.s32 256, 256
      %468 = vsyncadd [#allocation18], %s467
      %s469 = sshll.u32 [#allocation17], 4
      %s470 = int_to_ptr.vmem [resolvable:$true] %s469
      %475 = dma.vmem_to_hbm [thread:$0]  %s470, 256, %s10, [#allocation18], 128, 128, 8
    $region77: #{tpu_custom_call.1} parent=1 // pred_fallthru
      _
    // Predicated region
    $region78: #{tpu_custom_call.1} parent=1 // pred_check
      _
    $region79: #{tpu_custom_call.1} parent=1 // pred_check_branch
      %477 = sbr.rel (0) target = $region81
    $region80: #{tpu_custom_call.1} parent=1 // pred_region
      %s479 = ssub.s32 256, 256
      %480 = vsyncadd [#allocation18], %s479
      %s481 = sshll.u32 [#allocation19], 4
      %s482 = int_to_ptr.vmem [resolvable:$true] %s481
      %487 = dma.vmem_to_hbm [thread:$0]  %s482, 256, %s11, [#allocation18], 128, 128, 8
    $region81: #{tpu_custom_call.1} parent=1 // pred_fallthru
      _
    // Predicated region
    $region82: #{tpu_custom_call.1} parent=1 // pred_check
      _
    $region83: #{tpu_custom_call.1} parent=1 // pred_check_branch
      %489 = sbr.rel (0) target = $region85
    $region84: #{tpu_custom_call.1} parent=1 // pred_region
      %490 = dma.done [#allocation7], 256
    $region85: #{tpu_custom_call.1} parent=1 // pred_fallthru
      _
    // Predicated region
    $region86: #{tpu_custom_call.1} parent=1 // pred_check
      _
    $region87: #{tpu_custom_call.1} parent=1 // pred_check_branch
      %492 = sbr.rel (0) target = $region89
    $region88: #{tpu_custom_call.1} parent=1 // pred_region
      %493 = dma.done [#allocation18], 256
    $region89: #{tpu_custom_call.1} parent=1 // pred_fallthru
      _
    // Predicated region
    $region90: #{tpu_custom_call.1} parent=1 // pred_check
      _
    $region91: #{tpu_custom_call.1} parent=1 // pred_check_branch
      %495 = sbr.rel (0) target = $region93
    $region92: #{tpu_custom_call.1} parent=1 // pred_region
      %496 = dma.done [#allocation18], 256
    $region93: #{tpu_custom_call.1} parent=1 // pred_fallthru
      _
    %497 = vsyncpa [#allocation6], 1
    %498 = vsyncpa [#allocation9], 1
    %499 = vsyncpa [#allocation12], 1
    %500 = vsyncpa [#allocation15], 1
    %501 = vsyncpa [#allocation7], 1
    %502 = vsyncpa [#allocation18], 1

</llo_original>
